<compile_context>
chip_gen: v7x
topology: tpu7x:2x2x1
jax: 0.10.0
libtpu: 0.0.40
codegen_flags: <defaults>
</compile_context>

<pallas_src>
import numpy as np
import jax
import jax.numpy as jnp
from jax import lax
from jax.experimental import pallas as pl
from jax.experimental.pallas import tpu as pltpu


# ------------------------------ Pallas kernel -------------------------------

def _patch_embed_kernel(x_ref, w_ref, b_ref, o_ref):
    # (TM, PACK*K) bf16 @ (PACK*K, PACK*E) bf16 -> f32 MXU accumulate, + f32 bias
    acc = jnp.dot(x_ref[...], w_ref[...], preferred_element_type=jnp.float32)
    o_ref[...] = (acc + b_ref[...]).astype(o_ref.dtype)


# --------------------------- parameter preparation ---------------------------

def pack_patch_embed_params(conv_w, conv_b):
    """Build the lane-packed block-diagonal weight / packed bias.

    Depends only on the conv parameters: call once and cache (outside any
    per-step jit) instead of rebuilding every forward.
    """
    E, C, ph, pw = conv_w.shape
    K = C * ph * pw
    PACK = 128 // E if (E <= 128 and 128 % E == 0) else 1

    w_mat = conv_w.reshape(E, K).T.astype(jnp.bfloat16)            # (K, E)
    if PACK == 1:
        w_block = w_mat
    else:
        # Block-diagonal (PACK*K, PACK*E) == kron(I_PACK, w_mat), built in bf16.
        idx = jnp.arange(PACK)
        w_block = (jnp.zeros((PACK, K, PACK, E), jnp.bfloat16)
                   .at[idx, :, idx, :].set(w_mat)
                   .reshape(PACK * K, PACK * E))
    b_packed = jnp.tile(conv_b.astype(jnp.float32), PACK).reshape(1, PACK * E)
    return dict(w_block=w_block, b_packed=b_packed,
                pack=PACK, E=E, C=C, ph=ph, pw=pw, K=K)


def _choose_row_tile(R):
    """Largest multiple-of-8 divisor of R up to 1024, preferring >= 2 grid steps."""
    if R <= 8:
        return R                                   # single full-extent block
    cands = [d for d in range(8, min(R, 1024) + 1, 8) if R % d == 0]
    if not cands:
        return R                                   # full-extent block is always legal
    multi = [d for d in cands if R // d >= 2]      # keep both v7x TCs busy
    return max(multi) if multi else max(cands)


# --------------------------------- forward ----------------------------------

def patch_embed_forward(x, params, *, out_dtype=jnp.float32):
    """x: (B, C, H, W) -> (B, NP, E); matches Conv2d(k=s=patch).flatten(2).transpose(1,2)."""
    w_block, b_packed = params["w_block"], params["b_packed"]
    PACK, E, C = params["pack"], params["E"], params["C"]
    ph, pw, K = params["ph"], params["pw"], params["K"]

    B, Cx, H, W = x.shape
    assert Cx == C, "channel mismatch with conv weight"
    nh, nw = H // ph, W // pw
    NP = nh * nw
    rows = B * NP

    # ---- patch gather (pure layout, no compute): (c, kh, kw)-ordered rows ----
    # With allow_input_fusion below, XLA may fuse this transpose + bf16 cast
    # into the pallas_call input instead of a separate HBM round trip.
    patches = x.reshape(B, C, nh, ph, nw, pw)
    patches = patches.transpose(0, 2, 4, 1, 3, 5).reshape(rows, K)

    # Pad rows to a multiple of PACK so lane packing never degrades to a
    # masked 32-lane output store.
    rows_p = -(-rows // PACK) * PACK
    if rows_p != rows:
        patches = jnp.pad(patches, ((0, rows_p - rows), (0, 0)))
    R = rows_p // PACK
    Kp, Ep = PACK * K, PACK * E
    x_packed = patches.reshape(R, Kp).astype(jnp.bfloat16)

    TM = _choose_row_tile(R)
    grid = (R // TM,)

    out_bytes = np.dtype(out_dtype).itemsize
    cost = pl.CostEstimate(
        flops=2 * rows * K * E,
        transcendentals=0,
        bytes_accessed=int(R * Kp * 2 + Kp * Ep * 2 + Ep * 4 + R * Ep * out_bytes),
    )

    out = pl.pallas_call(
        _patch_embed_kernel,
        out_shape=jax.ShapeDtypeStruct((R, Ep), out_dtype),
        grid=grid,
        in_specs=[
            pl.BlockSpec((TM, Kp), lambda i: (i, 0)),   # packed patches (streamed)
            pl.BlockSpec((Kp, Ep), lambda i: (0, 0)),   # block-diag weight (resident)
            pl.BlockSpec((1, Ep), lambda i: (0, 0)),    # packed bias (resident)
        ],
        out_specs=pl.BlockSpec((TM, Ep), lambda i: (i, 0)),
        compiler_params=pltpu.CompilerParams(
            dimension_semantics=("parallel",),
            allow_input_fusion=[True, False, False],    # fuse patch gather into input
        ),
        cost_estimate=cost,
    )(x_packed, w_block, b_packed)

    # (R, PACK*E) row-major == (rows_p, E) row-major; drop row padding.
    return out.reshape(rows_p, E)[:rows].reshape(B, NP, E)


# ----------------------------- pure-JAX reference ----------------------------

def reference_forward(x, conv_w, conv_b, ph, pw):
    y = lax.conv_general_dilated(
        x, conv_w, window_strides=(ph, pw), padding="VALID",
        dimension_numbers=("NCHW", "OIHW", "NCHW"),
        precision=lax.Precision.HIGHEST)
    y = y + conv_b[None, :, None, None]
    B, E, nh, nw = y.shape
    return y.reshape(B, E, nh * nw).transpose(0, 2, 1)      # flatten(2).transpose(1,2)


# ----------------------------------- driver ----------------------------------

if __name__ == "__main__":
    key = jax.random.PRNGKey(0)
    kx, kw, kb = jax.random.split(key, 3)

    # Module defaults: H=16, W=32, patch_size=4, in_chans=2, embed_dim=32.
    B, C, H, W = 2, 2, 16, 32
    ps, E = 4, 32
    K = C * ps * ps

    x = jax.random.normal(kx, (B, C, H, W), jnp.float32)
    conv_w = jax.random.normal(kw, (E, C, ps, ps), jnp.float32) / np.sqrt(K)
    conv_b = 0.1 * jax.random.normal(kb, (E,), jnp.float32)

    params = pack_patch_embed_params(conv_w, conv_b)   # build once, reuse every step
    # TODO(synk): at the default shapes (8 KB output) the call is launch-bound;
    # fuse PatchEmbed with the downstream pos-embed add / pre-norm at the real
    # call site — the standalone kernel pays off on the large-rows path.
    out = jax.block_until_ready(patch_embed_forward(x, params))

    ref = reference_forward(x, conv_w, conv_b, ps, ps)
    np.testing.assert_allclose(np.asarray(out), np.asarray(ref),
                               rtol=2e-2, atol=2e-2)    # bf16-input MXU tolerance
    assert out.shape == (B, (H * W) // ps ** 2, E)      # (2, 32, 32)
    print("KERNEL_OK")
</pallas_src>

<mosaic_0001>
module attributes {stable_mosaic.version = 11 : i64} {
  func.func @_patch_embed_kernel(%arg0: i32, %arg1: memref<8x128xbf16, #tpu.memory_space<vmem>>, %arg2: memref<128x128xbf16, #tpu.memory_space<vmem>>, %arg3: memref<1x128xf32, #tpu.memory_space<vmem>>, %arg4: memref<8x128xf32, #tpu.memory_space<vmem>>) attributes {dimension_semantics = [#tpu.dimension_semantics<parallel>], iteration_bounds = array<i64: 2>, scalar_prefetch = 0 : i64, scratch_operands = 0 : i64, tpu.core_type = #tpu.core_type<tc>, window_params = [{transform_indices = @transform_0, window_bounds = array<i64: 8, 128>}, {pipeline_mode = #tpu.pipeline_mode<synchronous>, transform_indices = @transform_1, window_bounds = array<i64: 128, 128>}, {pipeline_mode = #tpu.pipeline_mode<synchronous>, transform_indices = @transform_2, window_bounds = array<i64: 1, 128>}, {transform_indices = @transform_3, window_bounds = array<i64: 8, 128>}]} {
    %c0 = arith.constant 0 : index
    %c0_0 = arith.constant 0 : index
    %0 = vector.load %arg1[%c0, %c0_0] : memref<8x128xbf16, #tpu.memory_space<vmem>>, vector<8x128xbf16>
    %c0_1 = arith.constant 0 : index
    %c0_2 = arith.constant 0 : index
    %1 = vector.load %arg2[%c0_1, %c0_2] : memref<128x128xbf16, #tpu.memory_space<vmem>>, vector<128x128xbf16>
    %cst = arith.constant dense<0.000000e+00> : vector<8x128xf32>
    %2 = tpu.matmul %0, %1, %cst {dimension_numbers = #tpu.dot_dimension_numbers<[1], [0], [0], [1], [0, 0, 1, 1], [], []>} : vector<8x128xbf16>, vector<128x128xbf16>, vector<8x128xf32> -> vector<8x128xf32>
    %c0_3 = arith.constant 0 : index
    %c0_4 = arith.constant 0 : index
    %3 = vector.load %arg3[%c0_3, %c0_4] : memref<1x128xf32, #tpu.memory_space<vmem>>, vector<1x128xf32>
    %4 = vector.broadcast %3 : vector<1x128xf32> to vector<8x128xf32>
    %5 = arith.addf %2, %4 : vector<8x128xf32>
    %c0_5 = arith.constant 0 : index
    %c0_6 = arith.constant 0 : index
    %6 = vector.load %arg4[%c0_5, %c0_6] : memref<8x128xf32, #tpu.memory_space<vmem>>, vector<8x128xf32>
    tpu.vector_store %arg4[%c0_5, %c0_6], %5 {strides = array<i32>} : memref<8x128xf32, #tpu.memory_space<vmem>>, vector<8x128xf32>,
    return
  }
  func.func @transform_0(%arg0: i32) -> (i32, i32) {
    %c0_i32 = arith.constant 0 : i32
    %c0_i32_0 = arith.constant 0 : i32
    return %arg0, %c0_i32 : i32, i32
  }
  func.func @transform_1(%arg0: i32) -> (i32, i32) {
    %c0_i32 = arith.constant 0 : i32
    %c0_i32_0 = arith.constant 0 : i32
    %c0_i32_1 = arith.constant 0 : i32
    return %c0_i32, %c0_i32_0 : i32, i32
  }
  func.func @transform_2(%arg0: i32) -> (i32, i32) {
    %c0_i32 = arith.constant 0 : i32
    %c0_i32_0 = arith.constant 0 : i32
    %c0_i32_1 = arith.constant 0 : i32
    return %c0_i32, %c0_i32_0 : i32, i32
  }
  func.func @transform_3(%arg0: i32) -> (i32, i32) {
    %c0_i32 = arith.constant 0 : i32
    %c0_i32_0 = arith.constant 0 : i32
    return %arg0, %c0_i32 : i32, i32
  }
}

</mosaic_0001>

<llo_original>
// kernel: tpu_custom_call.1
$region0: #{tpu_custom_call.1}
  #allocation0 [shape = 'u32[]', space=smem, size = 0x4, offset = 0x4, fixed_abs, tag = 'smem constant byte address 0x4 - core index']
  #allocation1 [shape = 'u32[144,128]{1,0:T(1,128)}', space=vmem, size = 0x12000, scoped, tag = 'internal scratch']
  %s0 = inlined_call_operand.hbm [shape: bf16[16,128], index: 0, kind: input, shape index: {}]
  %s1 = inlined_call_operand.hbm [shape: bf16[128,128], index: 1, kind: input, shape index: {}]
  %s2 = inlined_call_operand.vmem [shape: f32[1,128], index: 2, kind: input, shape index: {}]
  %s3 = inlined_call_operand.hbm [shape: f32[16,128], index: 3, kind: output, shape index: {}]
  %s4 = sld [smem:[#allocation0]]
  $region53: #{tpu_custom_call.1} parent=0
    _
  %s6 = ssub.s32 1, %s4
  %s7 = scalar_select 0, %s6, %s4
  $region1: #{tpu_custom_call.1} parent=0
    #allocation2 [shape = 'u8[4096]{0}', space=vmem, size = 0x1000, scoped, tag = 'input window, operand 0']
    #allocation3 [shape = 's32[2]{0}', space=sflag, size = 0x8, scoped, tag = 'scoped memory for tpu_custom_call.1']
    #allocation4 [shape = 's32[2]{0}', space=sflag, size = 0x8, scoped, tag = 'scoped memory for tpu_custom_call.1']
    #allocation5 [shape = 'u8[32768]{0}', space=vmem, size = 0x8000, scoped, tag = 'input window, operand 1, single buffered']
    #allocation6 [shape = 's32[1]{0}', space=sflag, size = 0x4, scoped, tag = 'scoped memory for tpu_custom_call.1']
    #allocation7 [shape = 'u8[8192]{0}', space=vmem, size = 0x2000, scoped, tag = 'output window, operand 0']
    %8 = vsyncpa [#allocation3], 0
    %s9 = scalar_lea.sflag [#allocation3], 1
    %10 = vsyncpa %s9, 0
    %11 = vsyncpa [#allocation6], 0
    %12 = vsyncpa [#allocation4], 0
    %s13 = scalar_lea.sflag [#allocation4], 1
    %14 = vsyncpa %s13, 0
    loop: start=0, step=1, limit=4
    $region2: #{tpu_custom_call.1} parent=1 // loop_pre_header
      _
    $region3: #{tpu_custom_call.1} parent=1 // loop_header
      %s16 = sphi 0, %s20
      %p17 = scmp.ge.s32.totalorder %s16, 4
      %s26 = sphi 0, %s28
      %s29 = sphi 0, %s26
      %s30 = sphi 0, %s29
      %s46 = sphi 0, %s30
      %s50 = sphi 0, %s50
      %s52 = sphi 0, %s50
      %s53 = sphi 0, %s52
      %s67 = sphi 0, %s53
      %s71 = sphi 0, %s71
      %s73 = sphi 0, %s71
      %s74 = sphi 0, %s73
      %s88 = sphi 0, %s74
      %s94 = sphi 0, %s96
      %s97 = sphi 0, %s94
      %s98 = sphi 0, %s97
      %s114 = sphi 0, %s98
    $region4: #{tpu_custom_call.1} parent=1 // loop_header_branch
      %19 = sbr.rel (%p17) target = $region8
    $region5: #{tpu_custom_call.1} parent=1 // loop_body
      %s21 = ssub.s32 %s16, 1
      %s22 = ssub.s32 %s16, 2
      %s23 = sadd.s32 %s16, 1
      %s24 = ssub.s32 %s16, %s23
      %p25 = scmp.eq.s32.totalorder %s24, 0
      %s27 = sadd.s32 %s26, 1
      %s28 = scalar_select %p25, %s26, %s27
      %p31 = pneg %p25
      %p32 = scmp.eq.s32.totalorder %s16, 1
      %p33 = por %p31, %p32
      %p34 = scmp.ne.s32.totalorder %s26, %s29
      %p35 = scmp.eq.s32.totalorder %s16, 0
      %p36 = por %p34, %p35
      %p37 = scmp.ne.s32.totalorder %s26, %s29
      %p38 = scmp.eq.s32.totalorder %s21, 1
      %p39 = por %p37, %p38
      %p40 = scmp.ne.s32.totalorder %s29, %s30
      %p41 = scmp.eq.s32.totalorder %s21, 0
      %p42 = por %p40, %p41
      %p43 = scmp.ne.s32.totalorder %s29, %s30
      %p44 = scmp.eq.s32.totalorder %s22, 1
      %p45 = por %p43, %p44
      %p47 = scmp.ne.s32.totalorder %s30, %s46
      %p48 = scmp.eq.s32.totalorder %s22, 0
      %p49 = por %p47, %p48
      %s51 = sadd.s32 %s50, 1
      %p54 = scmp.eq.s32.totalorder %s16, 1
      %p55 = scmp.ne.s32.totalorder %s50, %s52
      %p56 = scmp.eq.s32.totalorder %s16, 0
      %p57 = por %p55, %p56
      %p58 = scmp.ne.s32.totalorder %s50, %s52
      %p59 = scmp.eq.s32.totalorder %s21, 1
      %p60 = por %p58, %p59
      %p61 = scmp.ne.s32.totalorder %s52, %s53
      %p62 = scmp.eq.s32.totalorder %s21, 0
      %p63 = por %p61, %p62
      %p64 = scmp.ne.s32.totalorder %s52, %s53
      %p65 = scmp.eq.s32.totalorder %s22, 1
      %p66 = por %p64, %p65
      %p68 = scmp.ne.s32.totalorder %s53, %s67
      %p69 = scmp.eq.s32.totalorder %s22, 0
      %p70 = por %p68, %p69
      %s72 = sadd.s32 %s71, 1
      %p75 = scmp.eq.s32.totalorder %s16, 1
      %p76 = scmp.ne.s32.totalorder %s71, %s73
      %p77 = scmp.eq.s32.totalorder %s16, 0
      %p78 = por %p76, %p77
      %p79 = scmp.ne.s32.totalorder %s71, %s73
      %p80 = scmp.eq.s32.totalorder %s21, 1
      %p81 = por %p79, %p80
      %p82 = scmp.ne.s32.totalorder %s73, %s74
      %p83 = scmp.eq.s32.totalorder %s21, 0
      %p84 = por %p82, %p83
      %p85 = scmp.ne.s32.totalorder %s73, %s74
      %p86 = scmp.eq.s32.totalorder %s22, 1
      %p87 = por %p85, %p86
      %p89 = scmp.ne.s32.totalorder %s74, %s88
      %p90 = scmp.eq.s32.totalorder %s22, 0
      %p91 = por %p89, %p90
      %s92 = ssub.s32 %s16, %s23
      %p93 = scmp.eq.s32.totalorder %s92, 0
      %s95 = sadd.s32 %s94, 1
      %s96 = scalar_select %p93, %s94, %s95
      %p99 = pneg %p93
      %p100 = scmp.eq.s32.totalorder %s16, 1
      %p101 = por %p99, %p100
      %p102 = scmp.ne.s32.totalorder %s94, %s97
      %p103 = scmp.eq.s32.totalorder %s16, 0
      %p104 = por %p102, %p103
      %p105 = scmp.ne.s32.totalorder %s94, %s97
      %p106 = scmp.eq.s32.totalorder %s21, 1
      %p107 = por %p105, %p106
      %p108 = scmp.ne.s32.totalorder %s97, %s98
      %p109 = scmp.eq.s32.totalorder %s21, 0
      %p110 = por %p108, %p109
      %p111 = scmp.ne.s32.totalorder %s97, %s98
      %p112 = scmp.eq.s32.totalorder %s22, 1
      %p113 = por %p111, %p112
      %p115 = scmp.ne.s32.totalorder %s98, %s114
      %p116 = scmp.eq.s32.totalorder %s22, 0
      %p117 = por %p115, %p116
      %p118 = scmp.le.s32.totalorder 1, %s16
      %p119 = scmp.lt.s32.totalorder %s16, 3
      %p120 = pnand %p118, %p119
      %p121 = pneg %p120
      // Predicated region
      $region9: #{tpu_custom_call.1} parent=5 // pred_check
        _
      $region10: #{tpu_custom_call.1} parent=5 // pred_check_branch
        %123 = sbr.rel (%p120) target = $region12
      $region11: #{tpu_custom_call.1} parent=5 // pred_region
        %s124 = ssub.s32 %s16, 1
        // Predicated region
        $region13: #{tpu_custom_call.1} parent=11 // pred_check
          %p125 = pneg %p63
        $region14: #{tpu_custom_call.1} parent=11 // pred_check_branch
          %127 = sbr.rel (%p125) target = $region16
        $region15: #{tpu_custom_call.1} parent=11 // pred_region
          %s129 = ssub.s32 1024, 1024
          %130 = vsyncadd [#allocation6], %s129
          %s131 = sshll.u32 [#allocation5], 4
          %s132 = int_to_ptr.vmem [resolvable:$true] %s131
          %137 = dma.hbm_to_vmem [thread:$0]  %s1, 1024, %s132, [#allocation6], 64, 64, 4
        $region16: #{tpu_custom_call.1} parent=11 // pred_fallthru
          _
        // Predicated region
        $region17: #{tpu_custom_call.1} parent=11 // pred_check
          %p138 = pneg %p84
        $region18: #{tpu_custom_call.1} parent=11 // pred_check_branch
          %140 = sbr.rel (%p138) target = $region20
        $region19: #{tpu_custom_call.1} parent=11 // pred_region
          _
        $region20: #{tpu_custom_call.1} parent=11 // pred_fallthru
          _
      $region12: #{tpu_custom_call.1} parent=5 // pred_fallthru
        _
      %p141 = scmp.lt.s32.totalorder %s16, 2
      // Predicated region
      $region21: #{tpu_custom_call.1} parent=5 // pred_check
        %p142 = pneg %p141
      $region22: #{tpu_custom_call.1} parent=5 // pred_check_branch
        %144 = sbr.rel (%p142) target = $region24
      $region23: #{tpu_custom_call.1} parent=5 // pred_region
        // Predicated region
        $region25: #{tpu_custom_call.1} parent=23 // pred_check
          %p145 = pneg %p36
        $region26: #{tpu_custom_call.1} parent=23 // pred_check_branch
          %147 = sbr.rel (%p145) target = $region28
        $region27: #{tpu_custom_call.1} parent=23 // pred_region
          %s148 = sand.u32 %s26, 1
          %s149 = scalar_lea.sflag [#allocation3], %s148
          %s150 = sand.u32 %s26, 1
          %s151 = smul.addr %s150, 4
          %s152 = scalar_lea.vmem [#allocation2], %s151
          %s154 = ssub.s32 64, 64
          %155 = vsyncadd %s149, %s154
          %s156 = smul.addr %s16, 64
          %s157 = scalar_lea.hbm %s0, %s156
          %s159 = sshll.u32 %s152, 4
          %s160 = int_to_ptr.vmem [resolvable:$true] %s159
          %162 = dma.hbm_to_vmem [thread:$0]  %s157, 64, %s160, %s149
        $region28: #{tpu_custom_call.1} parent=23 // pred_fallthru
          _
      $region24: #{tpu_custom_call.1} parent=5 // pred_fallthru
        _
      %p163 = scmp.le.s32.totalorder 1, %s16
      %p164 = scmp.lt.s32.totalorder %s16, 3
      %p165 = pnand %p163, %p164
      %p166 = pneg %p165
      // Predicated region
      $region29: #{tpu_custom_call.1} parent=5 // pred_check
        _
      $region30: #{tpu_custom_call.1} parent=5 // pred_check_branch
        %168 = sbr.rel (%p165) target = $region32
      $region31: #{tpu_custom_call.1} parent=5 // pred_region
        %s169 = ssub.s32 %s16, 1
        %s170 = sand.u32 %s29, 1
        %s171 = scalar_lea.sflag [#allocation3], %s170
        %s172 = sand.u32 %s29, 1
        %s173 = smul.addr %s172, 4
        %s174 = scalar_lea.vmem [#allocation2], %s173
        // Predicated region
        $region33: #{tpu_custom_call.1} parent=31 // pred_check
          %p175 = pneg %p42
        $region34: #{tpu_custom_call.1} parent=31 // pred_check_branch
          %177 = sbr.rel (%p175) target = $region36
        $region35: #{tpu_custom_call.1} parent=31 // pred_region
          %178 = dma.done %s171, 64
        $region36: #{tpu_custom_call.1} parent=31 // pred_fallthru
          _
        // Predicated region
        $region37: #{tpu_custom_call.1} parent=31 // pred_check
          %p179 = pneg %p63
        $region38: #{tpu_custom_call.1} parent=31 // pred_check_branch
          %181 = sbr.rel (%p179) target = $region40
        $region39: #{tpu_custom_call.1} parent=31 // pred_region
          %182 = dma.done [#allocation6], 1024
        $region40: #{tpu_custom_call.1} parent=31 // pred_fallthru
          _
        %s183 = sand.u32 %s29, 1
        %s184 = scalar_lea.sflag [#allocation3], %s183
        %s185 = sand.u32 %s29, 1
        %s186 = smul.addr %s185, 4
        %s187 = scalar_lea.vmem [#allocation2], %s186
        %p188 = pneg %p42
        %p189 = pneg %p39
        %p190 = pneg %p63
        %p191 = pneg %p60
        %p192 = pneg %p84
        %p193 = pneg %p81
        %p194 = pneg %p110
        %p195 = pneg %p107
        %s196 = sand.u32 %s97, 1
        %s197 = scalar_lea.sflag [#allocation4], %s196
        %s198 = sand.u32 %s97, 1
        %s199 = smul.addr %s198, 8
        %s200 = scalar_lea.vmem [#allocation7], %s199
        %v202 = vld [vmem:[%s174] sm:$0xf]
        %v203 = vld [vmem:[#allocation5] sm:$0xf]
        %v204 = vld [vmem:[#allocation5 + $0x4] sm:$0xf]
        %v205 = vld [vmem:[#allocation5 + $0x8] sm:$0xf]
        %v206 = vld [vmem:[#allocation5 + $0xc] sm:$0xf]
        %v207 = vld [vmem:[#allocation5 + $0x10] sm:$0xf]
        %v208 = vld [vmem:[#allocation5 + $0x14] sm:$0xf]
        %v209 = vld [vmem:[#allocation5 + $0x18] sm:$0xf]
        %v210 = vld [vmem:[#allocation5 + $0x1c] sm:$0xf]
        %v211 = vld [vmem:[#allocation5 + $0x20] sm:$0xf]
        %v212 = vld [vmem:[#allocation5 + $0x24] sm:$0xf]
        %v213 = vld [vmem:[#allocation5 + $0x28] sm:$0xf]
        %v214 = vld [vmem:[#allocation5 + $0x2c] sm:$0xf]
        %v215 = vld [vmem:[#allocation5 + $0x30] sm:$0xf]
        %v216 = vld [vmem:[#allocation5 + $0x34] sm:$0xf]
        %v217 = vld [vmem:[#allocation5 + $0x38] sm:$0xf]
        %v218 = vld [vmem:[#allocation5 + $0x3c] sm:$0xf]
        %v219 = vld [vmem:[%s2] sm:$0x1]
        %v221 = vlaneseq
        %v222 = vshrl.u32 %v221, 7
        %v223 = vsub.s32 0, %v222
        %v224 = vrot.slane %v219, %v223
        %v242 = vunpack.c.l.b16 %v203
        %v243 = vunpack.c.l.b16 %v204
        %v244 = vunpack.c.l.b16 %v205
        %v245 = vunpack.c.l.b16 %v206
        %v246 = vunpack.c.l.b16 %v207
        %v247 = vunpack.c.l.b16 %v208
        %v248 = vunpack.c.l.b16 %v209
        %v249 = vunpack.c.l.b16 %v210
        %v250 = vunpack.c.l.b16 %v211
        %v251 = vunpack.c.l.b16 %v212
        %v252 = vunpack.c.l.b16 %v213
        %v253 = vunpack.c.l.b16 %v214
        %v254 = vunpack.c.l.b16 %v215
        %v255 = vunpack.c.l.b16 %v216
        %v256 = vunpack.c.l.b16 %v217
        %v257 = vunpack.c.l.b16 %v218
        %v258 = vpack.c.b16 %v243, %v242
        %v259 = vpack.c.b16 %v245, %v244
        %v260 = vpack.c.b16 %v247, %v246
        %v261 = vpack.c.b16 %v249, %v248
        %v262 = vpack.c.b16 %v251, %v250
        %v263 = vpack.c.b16 %v253, %v252
        %v264 = vpack.c.b16 %v255, %v254
        %v265 = vpack.c.b16 %v257, %v256
        %274 = vmatprep.subr.bf16.mxu0 0
        %275 = vmatpush1.bf16.msra.mxu0 %v258
        %276 = vmatprep.subr.bf16.mxu0 0
        %277 = vmatpush1.bf16.msra.mxu0 %v259
        %278 = vmatprep.subr.bf16.mxu0 0
        %279 = vmatpush1.bf16.msra.mxu0 %v260
        %280 = vmatprep.subr.bf16.mxu0 0
        %281 = vmatpush1.bf16.msra.mxu0 %v261
        %282 = vmatprep.subr.bf16.mxu0 0
        %283 = vmatpush1.bf16.msra.mxu0 %v262
        %284 = vmatprep.subr.bf16.mxu0 0
        %285 = vmatpush1.bf16.msra.mxu0 %v263
        %286 = vmatprep.subr.bf16.mxu0 0
        %287 = vmatpush1.bf16.msra.mxu0 %v264
        %288 = vmatprep.subr.bf16.mxu0 0
        %289 = vmatpush1.bf16.msra.mxu0 %v265
        %290 = vmatprep.subr.bf16.mxu0 0
        %291 = vmatpush1.bf16.msra.mxu0 0
        %292 = vmatprep.subr.bf16.mxu0 0
        %293 = vmatpush1.bf16.msra.mxu0 0
        %294 = vmatprep.subr.bf16.mxu0 0
        %295 = vmatpush1.bf16.msra.mxu0 0
        %296 = vmatprep.subr.bf16.mxu0 0
        %297 = vmatpush1.bf16.msra.mxu0 0
        %298 = vmatprep.subr.bf16.mxu0 0
        %299 = vmatpush1.bf16.msra.mxu0 0
        %300 = vmatprep.subr.bf16.mxu0 0
        %301 = vmatpush1.bf16.msra.mxu0 0
        %302 = vmatprep.subr.bf16.mxu0 0
        %303 = vmatpush1.bf16.msra.mxu0 0
        %304 = vmatprep.subr.bf16.mxu0 0
        %305 = vmatpush1.bf16.msra.mxu0 0
        %306 = vmatprep.mubr.bf16.mxu0 0
        %307 = vmatmul.mubr.bf16.gmra.mrb[0].mxu0 %v202
        %v308 = vpop.f32.mrb[0].mxu0
        %v309 = vadd.f32 %v224, %v308
        %v310 = vpop.f32.mrb[0].mxu0
        %v311 = vpop.f32.mrb[0].mxu0
        %v312 = vpop.f32.mrb[0].mxu0
        %313 = vdwg.mxu0
        %314 = vst [vmem:[%s200] sm:$0xff] %v309
        %s315 = sand.u32 %s97, 1
        %s316 = scalar_lea.sflag [#allocation4], %s315
        %s317 = sand.u32 %s97, 1
        %s318 = smul.addr %s317, 8
        %s319 = scalar_lea.vmem [#allocation7], %s318
        // Predicated region
        $region41: #{tpu_custom_call.1} parent=31 // pred_check
          %p320 = pneg %p107
        $region42: #{tpu_custom_call.1} parent=31 // pred_check_branch
          %322 = sbr.rel (%p320) target = $region44
        $region43: #{tpu_custom_call.1} parent=31 // pred_region
          %s324 = ssub.s32 128, 128
          %325 = vsyncadd %s316, %s324
          %s326 = smul.addr %s21, 128
          %s327 = scalar_lea.hbm %s3, %s326
          %s329 = sshll.u32 %s319, 4
          %s330 = int_to_ptr.vmem [resolvable:$true] %s329
          %332 = dma.vmem_to_hbm [thread:$0]  %s330, 128, %s327, %s316
        $region44: #{tpu_custom_call.1} parent=31 // pred_fallthru
          _
      $region32: #{tpu_custom_call.1} parent=5 // pred_fallthru
        _
      %p333 = scmp.le.s32.totalorder 2, %s16
      // Predicated region
      $region45: #{tpu_custom_call.1} parent=5 // pred_check
        %p334 = pneg %p333
      $region46: #{tpu_custom_call.1} parent=5 // pred_check_branch
        %336 = sbr.rel (%p334) target = $region48
      $region47: #{tpu_custom_call.1} parent=5 // pred_region
        %s337 = ssub.s32 %s16, 2
        // Predicated region
        $region49: #{tpu_custom_call.1} parent=47 // pred_check
          %p338 = pneg %p113
        $region50: #{tpu_custom_call.1} parent=47 // pred_check_branch
          %340 = sbr.rel (%p338) target = $region52
        $region51: #{tpu_custom_call.1} parent=47 // pred_region
          %s341 = sand.u32 %s98, 1
          %s342 = scalar_lea.sflag [#allocation4], %s341
          %s343 = sand.u32 %s98, 1
          %s344 = smul.addr %s343, 8
          %s345 = scalar_lea.vmem [#allocation7], %s344
          %346 = dma.done %s342, 128
        $region52: #{tpu_custom_call.1} parent=47 // pred_fallthru
          _
      $region48: #{tpu_custom_call.1} parent=5 // pred_fallthru
        _
    $region6: #{tpu_custom_call.1} parent=1 // loop_footer
      %s20 = sadd.s32 1, %s16
    $region7: #{tpu_custom_call.1} parent=1 // loop_footer_branch
      %15 = sbr.rel target = $region3
    $region8: #{tpu_custom_call.1} parent=1 // loop_exit
      _
    %347 = vsyncpa [#allocation3], 1
    %s348 = scalar_lea.sflag [#allocation3], 1
    %349 = vsyncpa %s348, 1
    %350 = vsyncpa [#allocation6], 1
    %351 = vsyncpa [#allocation4], 1
    %s352 = scalar_lea.sflag [#allocation4], 1
    %353 = vsyncpa %s352, 1

</llo_original>
